<compile_context>
chip_gen: v7x
topology: tpu7x:2x2x1
jax: 0.10.0
libtpu: 0.0.40
codegen_flags: <defaults>
</compile_context>

<pallas_src>
import functools

import jax
import jax.numpy as jnp
from jax.experimental import pallas as pl
from jax.experimental.pallas import tpu as pltpu


# ---------------------------------------------------------------------------
# Pallas kernel: one (batch, L-tile) step of the ConvModule forward
# ---------------------------------------------------------------------------
def conv_module_kernel(x_ref, xh_ref, w1a_ref, w1b_ref, wd_ref, bns_ref,
                       bnb_ref, w2_ref, b2_ref, o_ref, xwin_ref, dma_sem,
                       *, tl, tlw, kernel_size):
    b = pl.program_id(0)
    l = pl.program_id(1)

    # ---- manual DMA: fetch the (TL + halo) window of the left-padded input.
    # xh is zero-padded by pad_left on the left, so the window for output rows
    # [l*TL, (l+1)*TL) starts exactly at element l*TL.
    start = pl.multiple_of(l * tl, 16)
    cp = pltpu.make_async_copy(xh_ref.at[b, pl.ds(start, tlw), :],
                               xwin_ref, dma_sem)
    cp.start()
    cp.wait()

    xw = xwin_ref[...]                                    # (TLW, D) bf16

    # ---- pointwise_conv_1 split into the two GLU halves (bf16 MXU, f32 acc)
    a = jnp.dot(xw, w1a_ref[...], preferred_element_type=jnp.float32)
    gate = jnp.dot(xw, w1b_ref[...], preferred_element_type=jnp.float32)

    # ---- GLU(dim=channel): a * sigmoid(gate)   (includes halo rows)
    g = a * jax.nn.sigmoid(gate)                          # (TLW, D) f32

    # ---- depthwise Conv1d (groups=D, padding='same') along L.
    # out[t] = sum_k wd[k] * g[t + k]; halo rows supply the 'same' padding.
    # roll(g, TLW - k) puts g[t + k] at row t (XLU slot, no unaligned slices).
    wd = wd_ref[...]                                      # (K, D) f32
    acc = g[:tl, :] * wd[0:1, :]                          # init from tap 0
    for k in range(1, kernel_size):                       # static, unrolled
        shifted = pltpu.roll(g, shift=tlw - k, axis=0)
        acc = acc + shifted[:tl, :] * wd[k:k + 1, :]

    # ---- BatchNorm1d (eval mode, folded scale/shift) + SiLU
    u = acc * bns_ref[...] + bnb_ref[...]
    u = u * jax.nn.sigmoid(u)

    # ---- pointwise_conv_2 (with bias), bf16 MXU, f32 acc
    y2 = jnp.dot(u.astype(jnp.bfloat16), w2_ref[...],
                 preferred_element_type=jnp.float32) + b2_ref[...]

    # ---- dropout (inference: identity) + residual
    o_ref[0] = (x_ref[0] + y2).astype(o_ref.dtype)


# ---------------------------------------------------------------------------
# Wrapper
# ---------------------------------------------------------------------------
def conv_module_forward(x, params, *, kernel_size, tl=256):
    """x: (B, L, D) float32. Returns (B, L, D)."""
    B, L, D = x.shape
    K = kernel_size
    w1a, w1b, wd_kd, bn_scale, bn_shift, w2_t, b2 = params
    pad_left = (K - 1) // 2

    # L tile: multiple of 16 (bf16 sublane packing), capped by the sequence.
    tl = max(16, min((tl // 16) * 16, ((L + 15) // 16) * 16))
    nt = pl.cdiv(L, tl)
    Lt = nt * tl
    halo_p = ((K - 1 + 15) // 16) * 16 if K > 1 else 0    # halo rounded to 16
    tlw = tl + halo_p

    # Residual-path input: x padded to a whole number of L tiles (f32).
    x_res = jnp.pad(x, ((0, 0), (0, Lt - L), (0, 0)))

    # Conv-path input: left-pad by pad_left, right-pad so every window fits;
    # stored bf16 (feeds the MXU directly).  Zero rows give GLU output 0, so
    # this reproduces Conv1d(padding='same') exactly.
    xh = jnp.pad(x, ((0, 0), (pad_left, Lt + halo_p - pad_left - L), (0, 0)))
    xh = xh.astype(jnp.bfloat16)

    # Matmul weights in bf16 (cast once, outside the kernel).
    w1a_b = w1a.astype(jnp.bfloat16)
    w1b_b = w1b.astype(jnp.bfloat16)
    w2_b = w2_t.astype(jnp.bfloat16)

    kern = functools.partial(conv_module_kernel, tl=tl, tlw=tlw, kernel_size=K)
    rep = lambda b, l: (0, 0)     # parameters: same block every grid step

    cost = pl.CostEstimate(
        flops=6 * B * Lt * D * D + B * Lt * D * (2 * K + 10),
        transcendentals=2 * B * Lt * D,
        bytes_accessed=(8 * B * Lt * D                      # x_res + out (f32)
                        + 2 * B * (Lt + halo_p) * D         # xh (bf16)
                        + 3 * 2 * D * D + 4 * K * D + 12 * D),
    )

    out = pl.pallas_call(
        kern,
        out_shape=jax.ShapeDtypeStruct((B, Lt, D), x.dtype),
        grid_spec=pltpu.PrefetchScalarGridSpec(
            num_scalar_prefetch=0,
            grid=(B, nt),
            in_specs=[
                pl.BlockSpec((1, tl, D), lambda b, l: (b, l, 0)),  # x (residual)
                pl.BlockSpec(memory_space=pl.ANY),                 # xh (HBM, halo DMA)
                pl.BlockSpec((D, D), rep),                         # W1a^T (bf16)
                pl.BlockSpec((D, D), rep),                         # W1b^T (bf16)
                pl.BlockSpec((K, D), rep),                         # depthwise W (K, D)
                pl.BlockSpec((1, D), rep),                         # BN scale
                pl.BlockSpec((1, D), rep),                         # BN shift
                pl.BlockSpec((D, D), rep),                         # W2^T (bf16)
                pl.BlockSpec((1, D), rep),                         # b2
            ],
            out_specs=pl.BlockSpec((1, tl, D), lambda b, l: (b, l, 0)),
            scratch_shapes=[
                pltpu.VMEM((tlw, D), jnp.bfloat16),                # halo window
                pltpu.SemaphoreType.DMA,                           # its semaphore
            ],
        ),
        compiler_params=pltpu.CompilerParams(
            dimension_semantics=("parallel", "parallel"),
            vmem_limit_bytes=48 * 1024 * 1024,
        ),
        cost_estimate=cost,
    )(x_res, xh, w1a_b, w1b_b, wd_kd, bn_scale, bn_shift, w2_b, b2)

    return out[:, :L, :]


# ---------------------------------------------------------------------------
# Pure-JAX f32 reference (mirrors the PyTorch forward exactly)
# ---------------------------------------------------------------------------
def conv_module_reference(x, params, *, kernel_size):
    B, L, D = x.shape
    K = kernel_size
    w1a, w1b, wd_kd, bn_scale, bn_shift, w2_t, b2 = params
    pad_left = (K - 1) // 2
    pad_right = (K - 1) - pad_left

    # (LayerNorm result is discarded in the reference forward — skipped.)
    a = jnp.einsum("bld,de->ble", x, w1a)                  # pointwise_conv_1 (value half)
    gate = jnp.einsum("bld,de->ble", x, w1b)               # pointwise_conv_1 (gate half)
    g = a * jax.nn.sigmoid(gate)                           # GLU
    gp = jnp.pad(g, ((0, 0), (pad_left, pad_right), (0, 0)))
    z = jnp.zeros_like(g)
    for k in range(K):                                     # depthwise conv
        z = z + gp[:, k:k + L, :] * wd_kd[k][None, None, :]
    u = z * bn_scale + bn_shift                            # BatchNorm1d (eval)
    u = u * jax.nn.sigmoid(u)                              # SiLU
    y2 = jnp.einsum("bld,de->ble", u, w2_t) + b2           # pointwise_conv_2
    return x + y2                                          # dropout = identity


# ---------------------------------------------------------------------------
# Deterministic parameter construction (shapes per nn.Module __init__)
# ---------------------------------------------------------------------------
def make_params(key, model_dim, kernel_size):
    D, K = model_dim, kernel_size
    k1, k2, k3, k4, k5, k6, k7, k8 = jax.random.split(key, 8)

    # pointwise_conv_1: Conv1d weight (2D, D, 1), no bias — pre-split for GLU.
    w1 = jax.random.normal(k1, (2 * D, D), jnp.float32) * 0.05
    w1a_t = w1[:D].T        # (D, D): GLU value half
    w1b_t = w1[D:].T        # (D, D): GLU gate half

    # deepthwise_conv: weight (D, 1, K), groups=D -> pass as (K, D)
    wd = jax.random.normal(k2, (D, K), jnp.float32) * 0.1
    wd_kd = wd.T

    # BatchNorm1d (eval): fold running stats + affine into per-channel scale/shift
    gamma = 1.0 + 0.1 * jax.random.normal(k3, (D,), jnp.float32)
    beta = 0.1 * jax.random.normal(k4, (D,), jnp.float32)
    running_mean = 0.05 * jax.random.normal(k5, (D,), jnp.float32)
    running_var = 1.0 + 0.1 * jax.random.uniform(k6, (D,), jnp.float32)
    eps = 1e-5
    inv = 1.0 / jnp.sqrt(running_var + eps)
    bn_scale = (gamma * inv).reshape(1, D)
    bn_shift = (beta - running_mean * gamma * inv).reshape(1, D)

    # pointwise_conv_2: Conv1d weight (D, D, 1) + bias (D,)
    w2 = jax.random.normal(k7, (D, D), jnp.float32) * 0.05
    w2_t = w2.T
    b2 = (0.05 * jax.random.normal(k8, (D,), jnp.float32)).reshape(1, D)

    return (w1a_t, w1b_t, wd_kd, bn_scale, bn_shift, w2_t, b2)


if __name__ == "__main__":
    B, L, D = 2, 56, 128        # small shapes; D=128 keeps lanes dense
    K = 5                       # deepthwise_kernel
    TL = 32                     # L tile -> 2 tiles per batch item (exercises halo)

    key = jax.random.PRNGKey(0)
    kx, kp = jax.random.split(key)
    x = jax.random.normal(kx, (B, L, D), jnp.float32)
    params = make_params(kp, D, K)

    out = conv_module_forward(x, params, kernel_size=K, tl=TL)
    out = jax.block_until_ready(out)

    ref = conv_module_reference(x, params, kernel_size=K)
    assert out.shape == (B, L, D)
    max_err = jnp.max(jnp.abs(out - ref))
    # bf16 matmul operands vs f32 reference -> loosened tolerance.
    assert jnp.allclose(out, ref, atol=2e-2, rtol=2e-2), (
        f"mismatch vs JAX reference (max abs err {max_err})")

    print("KERNEL_OK")
</pallas_src>

<mosaic_0001>
module attributes {stable_mosaic.version = 11 : i64} {
  func.func @conv_module_kernel(%arg0: i32, %arg1: i32, %arg2: memref<1x32x128xf32, #tpu.memory_space<vmem>>, %arg3: memref<2x80x128xbf16, #tpu.memory_space<any>>, %arg4: memref<128x128xbf16, #tpu.memory_space<vmem>>, %arg5: memref<128x128xbf16, #tpu.memory_space<vmem>>, %arg6: memref<5x128xf32, #tpu.memory_space<vmem>>, %arg7: memref<1x128xf32, #tpu.memory_space<vmem>>, %arg8: memref<1x128xf32, #tpu.memory_space<vmem>>, %arg9: memref<128x128xbf16, #tpu.memory_space<vmem>>, %arg10: memref<1x128xf32, #tpu.memory_space<vmem>>, %arg11: memref<1x32x128xf32, #tpu.memory_space<vmem>>, %arg12: memref<48x128xbf16, #tpu.memory_space<vmem>>, %arg13: memref<!tpu.dma_semaphore, #tpu.memory_space<semaphore_mem>>) attributes {dimension_semantics = [#tpu.dimension_semantics<parallel>, #tpu.dimension_semantics<parallel>], iteration_bounds = array<i64: 2, 2>, scalar_prefetch = 0 : i64, scratch_operands = 2 : i64, tpu.core_type = #tpu.core_type<tc>, window_params = [{transform_indices = @transform_0, window_bounds = array<i64: 1, 32, 128>}, {}, {pipeline_mode = #tpu.pipeline_mode<synchronous>, transform_indices = @transform_2, window_bounds = array<i64: 128, 128>}, {pipeline_mode = #tpu.pipeline_mode<synchronous>, transform_indices = @transform_3, window_bounds = array<i64: 128, 128>}, {pipeline_mode = #tpu.pipeline_mode<synchronous>, transform_indices = @transform_4, window_bounds = array<i64: 5, 128>}, {pipeline_mode = #tpu.pipeline_mode<synchronous>, transform_indices = @transform_5, window_bounds = array<i64: 1, 128>}, {pipeline_mode = #tpu.pipeline_mode<synchronous>, transform_indices = @transform_6, window_bounds = array<i64: 1, 128>}, {pipeline_mode = #tpu.pipeline_mode<synchronous>, transform_indices = @transform_7, window_bounds = array<i64: 128, 128>}, {pipeline_mode = #tpu.pipeline_mode<synchronous>, transform_indices = @transform_8, window_bounds = array<i64: 1, 128>}, {transform_indices = @transform_9, window_bounds = array<i64: 1, 32, 128>}]} {
    %c32_i32 = arith.constant 32 : i32
    %0 = arith.muli %arg1, %c32_i32 : i32
    %1 = tpu.assume_multiple %0, 16 : i32
    %c0_i32 = arith.constant 0 : i32
    %2 = tpu.memref_slice %arg3[%arg0, %1, %c0_i32] : memref<2x80x128xbf16, #tpu.memory_space<any>> -> memref<1x48x128xbf16, #tpu.memory_space<any>>
    %3 = tpu.memref_squeeze %2 : memref<1x48x128xbf16, #tpu.memory_space<any>> -> memref<48x128xbf16, #tpu.memory_space<any>>
    tpu.enqueue_dma source(%3 : memref<48x128xbf16, #tpu.memory_space<any>>) target(%arg12 : memref<48x128xbf16, #tpu.memory_space<vmem>>) target_semaphore(%arg13 : memref<!tpu.dma_semaphore, #tpu.memory_space<semaphore_mem>>)
    %c0_i32_0 = arith.constant 0 : i32
    %4 = tpu.memref_slice %arg3[%arg0, %1, %c0_i32_0] : memref<2x80x128xbf16, #tpu.memory_space<any>> -> memref<1x48x128xbf16, #tpu.memory_space<any>>
    %5 = tpu.memref_squeeze %4 : memref<1x48x128xbf16, #tpu.memory_space<any>> -> memref<48x128xbf16, #tpu.memory_space<any>>
    tpu.wait_dma2 semaphore(%arg13 : memref<!tpu.dma_semaphore, #tpu.memory_space<semaphore_mem>>) src(%5 : memref<48x128xbf16, #tpu.memory_space<any>>) dst(%arg12 : memref<48x128xbf16, #tpu.memory_space<vmem>>)
    %c0 = arith.constant 0 : index
    %c0_1 = arith.constant 0 : index
    %6 = vector.load %arg12[%c0, %c0_1] : memref<48x128xbf16, #tpu.memory_space<vmem>>, vector<48x128xbf16>
    %c0_2 = arith.constant 0 : index
    %c0_3 = arith.constant 0 : index
    %7 = vector.load %arg4[%c0_2, %c0_3] : memref<128x128xbf16, #tpu.memory_space<vmem>>, vector<128x128xbf16>
    %cst = arith.constant dense<0.000000e+00> : vector<48x128xf32>
    %8 = tpu.matmul %6, %7, %cst {dimension_numbers = #tpu.dot_dimension_numbers<[1], [0], [0], [1], [0, 0, 1, 1], [], []>} : vector<48x128xbf16>, vector<128x128xbf16>, vector<48x128xf32> -> vector<48x128xf32>
    %c0_4 = arith.constant 0 : index
    %c0_5 = arith.constant 0 : index
    %9 = vector.load %arg5[%c0_4, %c0_5] : memref<128x128xbf16, #tpu.memory_space<vmem>>, vector<128x128xbf16>
    %cst_6 = arith.constant dense<0.000000e+00> : vector<48x128xf32>
    %10 = tpu.matmul %6, %9, %cst_6 {dimension_numbers = #tpu.dot_dimension_numbers<[1], [0], [0], [1], [0, 0, 1, 1], [], []>} : vector<48x128xbf16>, vector<128x128xbf16>, vector<48x128xf32> -> vector<48x128xf32>
    %11 = arith.negf %10 : vector<48x128xf32>
    %12 = math.exp %11 : vector<48x128xf32>
    %cst_7 = arith.constant 1.000000e+00 : f32
    %13 = vector.broadcast %cst_7 : f32 to vector<48x128xf32>
    %14 = arith.addf %13, %12 : vector<48x128xf32>
    %15 = arith.divf %13, %14 : vector<48x128xf32>
    %16 = arith.mulf %8, %15 : vector<48x128xf32>
    %c0_8 = arith.constant 0 : index
    %c0_9 = arith.constant 0 : index
    %17 = vector.load %arg6[%c0_8, %c0_9] : memref<5x128xf32, #tpu.memory_space<vmem>>, vector<5x128xf32>
    %18 = vector.extract_strided_slice %16 {offsets = [0, 0], sizes = [32, 128], strides = [1, 1]} : vector<48x128xf32> to vector<32x128xf32>
    %19 = vector.extract_strided_slice %17 {offsets = [0, 0], sizes = [1, 128], strides = [1, 1]} : vector<5x128xf32> to vector<1x128xf32>
    %20 = vector.broadcast %19 : vector<1x128xf32> to vector<32x128xf32>
    %21 = arith.mulf %18, %20 : vector<32x128xf32>
    %c47_i32 = arith.constant 47 : i32
    %22 = tpu.dynamic_rotate %16 by %c47_i32 dim 0 : vector<48x128xf32>, i32 -> vector<48x128xf32>
    %23 = vector.extract_strided_slice %22 {offsets = [0, 0], sizes = [32, 128], strides = [1, 1]} : vector<48x128xf32> to vector<32x128xf32>
    %24 = vector.extract_strided_slice %17 {offsets = [1, 0], sizes = [1, 128], strides = [1, 1]} : vector<5x128xf32> to vector<1x128xf32>
    %25 = vector.broadcast %24 : vector<1x128xf32> to vector<32x128xf32>
    %26 = arith.mulf %23, %25 : vector<32x128xf32>
    %27 = arith.addf %21, %26 : vector<32x128xf32>
    %c46_i32 = arith.constant 46 : i32
    %28 = tpu.dynamic_rotate %16 by %c46_i32 dim 0 : vector<48x128xf32>, i32 -> vector<48x128xf32>
    %29 = vector.extract_strided_slice %28 {offsets = [0, 0], sizes = [32, 128], strides = [1, 1]} : vector<48x128xf32> to vector<32x128xf32>
    %30 = vector.extract_strided_slice %17 {offsets = [2, 0], sizes = [1, 128], strides = [1, 1]} : vector<5x128xf32> to vector<1x128xf32>
    %31 = vector.broadcast %30 : vector<1x128xf32> to vector<32x128xf32>
    %32 = arith.mulf %29, %31 : vector<32x128xf32>
    %33 = arith.addf %27, %32 : vector<32x128xf32>
    %c45_i32 = arith.constant 45 : i32
    %34 = tpu.dynamic_rotate %16 by %c45_i32 dim 0 : vector<48x128xf32>, i32 -> vector<48x128xf32>
    %35 = vector.extract_strided_slice %34 {offsets = [0, 0], sizes = [32, 128], strides = [1, 1]} : vector<48x128xf32> to vector<32x128xf32>
    %36 = vector.extract_strided_slice %17 {offsets = [3, 0], sizes = [1, 128], strides = [1, 1]} : vector<5x128xf32> to vector<1x128xf32>
    %37 = vector.broadcast %36 : vector<1x128xf32> to vector<32x128xf32>
    %38 = arith.mulf %35, %37 : vector<32x128xf32>
    %39 = arith.addf %33, %38 : vector<32x128xf32>
    %c44_i32 = arith.constant 44 : i32
    %40 = tpu.dynamic_rotate %16 by %c44_i32 dim 0 : vector<48x128xf32>, i32 -> vector<48x128xf32>
    %41 = vector.extract_strided_slice %40 {offsets = [0, 0], sizes = [32, 128], strides = [1, 1]} : vector<48x128xf32> to vector<32x128xf32>
    %42 = vector.extract_strided_slice %17 {offsets = [4, 0], sizes = [1, 128], strides = [1, 1]} : vector<5x128xf32> to vector<1x128xf32>
    %43 = vector.broadcast %42 : vector<1x128xf32> to vector<32x128xf32>
    %44 = arith.mulf %41, %43 : vector<32x128xf32>
    %45 = arith.addf %39, %44 : vector<32x128xf32>
    %c0_10 = arith.constant 0 : index
    %c0_11 = arith.constant 0 : index
    %46 = vector.load %arg7[%c0_10, %c0_11] : memref<1x128xf32, #tpu.memory_space<vmem>>, vector<1x128xf32>
    %47 = vector.broadcast %46 : vector<1x128xf32> to vector<32x128xf32>
    %48 = arith.mulf %45, %47 : vector<32x128xf32>
    %c0_12 = arith.constant 0 : index
    %c0_13 = arith.constant 0 : index
    %49 = vector.load %arg8[%c0_12, %c0_13] : memref<1x128xf32, #tpu.memory_space<vmem>>, vector<1x128xf32>
    %50 = vector.broadcast %49 : vector<1x128xf32> to vector<32x128xf32>
    %51 = arith.addf %48, %50 : vector<32x128xf32>
    %52 = arith.negf %51 : vector<32x128xf32>
    %53 = math.exp %52 : vector<32x128xf32>
    %cst_14 = arith.constant 1.000000e+00 : f32
    %54 = vector.broadcast %cst_14 : f32 to vector<32x128xf32>
    %55 = arith.addf %54, %53 : vector<32x128xf32>
    %56 = arith.divf %54, %55 : vector<32x128xf32>
    %57 = arith.mulf %51, %56 : vector<32x128xf32>
    %58 = arith.truncf %57 : vector<32x128xf32> to vector<32x128xbf16>
    %c0_15 = arith.constant 0 : index
    %c0_16 = arith.constant 0 : index
    %59 = vector.load %arg9[%c0_15, %c0_16] : memref<128x128xbf16, #tpu.memory_space<vmem>>, vector<128x128xbf16>
    %cst_17 = arith.constant dense<0.000000e+00> : vector<32x128xf32>
    %60 = tpu.matmul %58, %59, %cst_17 {dimension_numbers = #tpu.dot_dimension_numbers<[1], [0], [0], [1], [0, 0, 1, 1], [], []>} : vector<32x128xbf16>, vector<128x128xbf16>, vector<32x128xf32> -> vector<32x128xf32>
    %c0_18 = arith.constant 0 : index
    %c0_19 = arith.constant 0 : index
    %61 = vector.load %arg10[%c0_18, %c0_19] : memref<1x128xf32, #tpu.memory_space<vmem>>, vector<1x128xf32>
    %62 = vector.broadcast %61 : vector<1x128xf32> to vector<32x128xf32>
    %63 = arith.addf %60, %62 : vector<32x128xf32>
    %c0_20 = arith.constant 0 : index
    %c0_21 = arith.constant 0 : index
    %c0_22 = arith.constant 0 : index
    %64 = vector.load %arg2[%c0_20, %c0_21, %c0_22] : memref<1x32x128xf32, #tpu.memory_space<vmem>>, vector<1x32x128xf32>
    %65 = vector.shape_cast %64 : vector<1x32x128xf32> to vector<32x128xf32>
    %66 = arith.addf %65, %63 : vector<32x128xf32>
    %c0_23 = arith.constant 0 : index
    %c0_24 = arith.constant 0 : index
    %c0_25 = arith.constant 0 : index
    %67 = vector.load %arg11[%c0_23, %c0_24, %c0_25] : memref<1x32x128xf32, #tpu.memory_space<vmem>>, vector<1x32x128xf32>
    %68 = vector.shape_cast %67 : vector<1x32x128xf32> to vector<32x128xf32>
    %69 = vector.shape_cast %66 : vector<32x128xf32> to vector<1x32x128xf32>
    tpu.vector_store %arg11[%c0_23, %c0_24, %c0_25], %69 {strides = array<i32>} : memref<1x32x128xf32, #tpu.memory_space<vmem>>, vector<1x32x128xf32>,
    return
  }
  func.func @transform_0(%arg0: i32, %arg1: i32) -> (i32, i32, i32) {
    %c0_i32 = arith.constant 0 : i32
    %c0_i32_0 = arith.constant 0 : i32
    return %arg0, %arg1, %c0_i32 : i32, i32, i32
  }
  func.func @transform_2(%arg0: i32, %arg1: i32) -> (i32, i32) {
    %c0_i32 = arith.constant 0 : i32
    %c0_i32_0 = arith.constant 0 : i32
    %c0_i32_1 = arith.constant 0 : i32
    return %c0_i32, %c0_i32_0 : i32, i32
  }
  func.func @transform_3(%arg0: i32, %arg1: i32) -> (i32, i32) {
    %c0_i32 = arith.constant 0 : i32
    %c0_i32_0 = arith.constant 0 : i32
    %c0_i32_1 = arith.constant 0 : i32
    return %c0_i32, %c0_i32_0 : i32, i32
  }
  func.func @transform_4(%arg0: i32, %arg1: i32) -> (i32, i32) {
    %c0_i32 = arith.constant 0 : i32
    %c0_i32_0 = arith.constant 0 : i32
    %c0_i32_1 = arith.constant 0 : i32
    return %c0_i32, %c0_i32_0 : i32, i32
  }
  func.func @transform_5(%arg0: i32, %arg1: i32) -> (i32, i32) {
    %c0_i32 = arith.constant 0 : i32
    %c0_i32_0 = arith.constant 0 : i32
    %c0_i32_1 = arith.constant 0 : i32
    return %c0_i32, %c0_i32_0 : i32, i32
  }
  func.func @transform_6(%arg0: i32, %arg1: i32) -> (i32, i32) {
    %c0_i32 = arith.constant 0 : i32
    %c0_i32_0 = arith.constant 0 : i32
    %c0_i32_1 = arith.constant 0 : i32
    return %c0_i32, %c0_i32_0 : i32, i32
  }
  func.func @transform_7(%arg0: i32, %arg1: i32) -> (i32, i32) {
    %c0_i32 = arith.constant 0 : i32
    %c0_i32_0 = arith.constant 0 : i32
    %c0_i32_1 = arith.constant 0 : i32
    return %c0_i32, %c0_i32_0 : i32, i32
  }
  func.func @transform_8(%arg0: i32, %arg1: i32) -> (i32, i32) {
    %c0_i32 = arith.constant 0 : i32
    %c0_i32_0 = arith.constant 0 : i32
    %c0_i32_1 = arith.constant 0 : i32
    return %c0_i32, %c0_i32_0 : i32, i32
  }
  func.func @transform_9(%arg0: i32, %arg1: i32) -> (i32, i32, i32) {
    %c0_i32 = arith.constant 0 : i32
    %c0_i32_0 = arith.constant 0 : i32
    return %arg0, %arg1, %c0_i32 : i32, i32, i32
  }
}

</mosaic_0001>

<llo_original>
// kernel: tpu_custom_call.1
$region0: #{tpu_custom_call.1}
  #allocation0 [shape = 'u32[]', space=smem, size = 0x4, offset = 0x4, fixed_abs, tag = 'smem constant byte address 0x4 - core index']
  #allocation1 [shape = 'u32[144,128]{1,0:T(1,128)}', space=vmem, size = 0x12000, scoped, tag = 'internal scratch']
  #allocation2 [shape = 'bf16[48,128]{1,0:T(16,128)(2,1)}', space=vmem, size = 0x3000, scoped, tag = 'scratch operand']
  #allocation3 [shape = 's32[1]{0}', space=sflag, size = 0x4, scoped, tag = 'scratch operand']
  #allocation13 [shape = 's32[]', space=sflag, size = 0x4, offset = 0, fixed_abs, tag = 'sflag constant byte address 0x0 - dummy sync flag']
  #allocation14 [shape = 's32[]', space=sflag, size = 0x4, offset = 0, fixed_abs, tag = 'sflag constant byte address 0x0 - dummy sync flag']
  #allocation15 [shape = 'u32[]', space=smem, size = 0x4, offset = 0x44, fixed_abs, tag = 'smem constant byte address 0x44 - assertion arg 0']
  #allocation16 [shape = 'u32[]', space=smem, size = 0x4, offset = 0x48, fixed_abs, tag = 'smem constant byte address 0x48 - assertion arg 1']
  %s0 = inlined_call_operand.hbm [shape: f32[2,64,128], index: 0, kind: input, shape index: {}]
  %s1 = inlined_call_operand.hbm [shape: bf16[2,80,128], index: 1, kind: input, shape index: {}]
  %s2 = inlined_call_operand.hbm [shape: bf16[128,128], index: 2, kind: input, shape index: {}]
  %s3 = inlined_call_operand.hbm [shape: bf16[128,128], index: 3, kind: input, shape index: {}]
  %s4 = inlined_call_operand.vmem [shape: f32[5,128], index: 4, kind: input, shape index: {}]
  %s5 = inlined_call_operand.vmem [shape: f32[1,128], index: 5, kind: input, shape index: {}]
  %s6 = inlined_call_operand.vmem [shape: f32[1,128], index: 6, kind: input, shape index: {}]
  %s7 = inlined_call_operand.hbm [shape: bf16[128,128], index: 7, kind: input, shape index: {}]
  %s8 = inlined_call_operand.vmem [shape: f32[1,128], index: 8, kind: input, shape index: {}]
  %s9 = inlined_call_operand.hbm [shape: f32[2,64,128], index: 9, kind: output, shape index: {}]
  %s10 = sld [smem:[#allocation0]]
  $region85: #{tpu_custom_call.1} parent=0
    _
  %s12 = ssub.s32 1, %s10
  %s13 = scalar_select 0, %s12, %s10
  $region1: #{tpu_custom_call.1} parent=0
    #allocation4 [shape = 'u8[32768]{0}', space=vmem, size = 0x8000, scoped, tag = 'input window, operand 0']
    #allocation5 [shape = 's32[2]{0}', space=sflag, size = 0x8, scoped, tag = 'scoped memory for tpu_custom_call.1']
    #allocation6 [shape = 's32[2]{0}', space=sflag, size = 0x8, scoped, tag = 'scoped memory for tpu_custom_call.1']
    #allocation7 [shape = 'u8[32768]{0}', space=vmem, size = 0x8000, scoped, tag = 'input window, operand 2, single buffered']
    #allocation8 [shape = 's32[1]{0}', space=sflag, size = 0x4, scoped, tag = 'scoped memory for tpu_custom_call.1']
    #allocation9 [shape = 'u8[32768]{0}', space=vmem, size = 0x8000, scoped, tag = 'input window, operand 3, single buffered']
    #allocation10 [shape = 'u8[32768]{0}', space=vmem, size = 0x8000, scoped, tag = 'input window, operand 7, single buffered']
    #allocation11 [shape = 's32[1]{0}', space=sflag, size = 0x4, scoped, tag = 'scoped memory for tpu_custom_call.1']
    #allocation12 [shape = 'u8[32768]{0}', space=vmem, size = 0x8000, scoped, tag = 'output window, operand 0']
    %14 = vsyncpa [#allocation5], 0
    %s15 = scalar_lea.sflag [#allocation5], 1
    %16 = vsyncpa %s15, 0
    %17 = vsyncpa [#allocation8], 0
    %18 = vsyncpa [#allocation11], 0
    %19 = vsyncpa [#allocation6], 0
    %s20 = scalar_lea.sflag [#allocation6], 1
    %21 = vsyncpa %s20, 0
    loop: start=0, step=1, limit=6
    $region2: #{tpu_custom_call.1} parent=1 // loop_pre_header
      _
    $region3: #{tpu_custom_call.1} parent=1 // loop_header
      %s23 = sphi 0, %s27
      %p24 = scmp.ge.s32.totalorder %s23, 6
      %s30 = sphi 0, %s42
      %s31 = sphi 0, %s38
      %s32 = sphi 0, %s30
      %s33 = sphi 0, %s31
      %s34 = sphi 0, %s32
      %s35 = sphi 0, %s33
      %s47 = sphi 0, %s49
      %s50 = sphi 0, %s47
      %s51 = sphi 0, %s50
      %s67 = sphi 0, %s51
      %s71 = sphi 0, %s71
      %s73 = sphi 0, %s71
      %s74 = sphi 0, %s73
      %s88 = sphi 0, %s74
      %s92 = sphi 0, %s92
      %s94 = sphi 0, %s92
      %s95 = sphi 0, %s94
      %s109 = sphi 0, %s95
      %s113 = sphi 0, %s113
      %s115 = sphi 0, %s113
      %s116 = sphi 0, %s115
      %s130 = sphi 0, %s116
      %s134 = sphi 0, %s134
      %s136 = sphi 0, %s134
      %s137 = sphi 0, %s136
      %s151 = sphi 0, %s137
      %s155 = sphi 0, %s155
      %s157 = sphi 0, %s155
      %s158 = sphi 0, %s157
      %s172 = sphi 0, %s158
      %s176 = sphi 0, %s176
      %s178 = sphi 0, %s176
      %s179 = sphi 0, %s178
      %s193 = sphi 0, %s179
      %s197 = sphi 0, %s197
      %s199 = sphi 0, %s197
      %s200 = sphi 0, %s199
      %s214 = sphi 0, %s200
      %s222 = sphi 0, %s224
      %s225 = sphi 0, %s222
      %s226 = sphi 0, %s225
      %s242 = sphi 0, %s226
    $region4: #{tpu_custom_call.1} parent=1 // loop_header_branch
      %26 = sbr.rel (%p24) target = $region8
    $region5: #{tpu_custom_call.1} parent=1 // loop_body
      %s28 = ssub.s32 %s23, 1
      %s29 = ssub.s32 %s23, 2
      %s36 = sadd.s32 1, %s31
      %p37 = scmp.ge.s32.totalorder %s36, 2
      %s38 = scalar_select %p37, 0, %s36
      %s39 = sadd.s32 1, %s30
      %s40 = scalar_select %p37, %s39, %s30
      %p41 = scmp.ge.s32.totalorder %s40, 2
      %s42 = scalar_select %p41, 0, %s40
      %s43 = ssub.s32 %s30, %s42
      %s44 = ssub.s32 %s31, %s38
      %s45 = sor.u32 %s43, %s44
      %p46 = scmp.eq.s32.totalorder %s45, 0
      %s48 = sadd.s32 %s47, 1
      %s49 = scalar_select %p46, %s47, %s48
      %p52 = pneg %p46
      %p53 = scmp.eq.s32.totalorder %s23, 3
      %p54 = por %p52, %p53
      %p55 = scmp.ne.s32.totalorder %s47, %s50
      %p56 = scmp.eq.s32.totalorder %s23, 0
      %p57 = por %p55, %p56
      %p58 = scmp.ne.s32.totalorder %s47, %s50
      %p59 = scmp.eq.s32.totalorder %s28, 3
      %p60 = por %p58, %p59
      %p61 = scmp.ne.s32.totalorder %s50, %s51
      %p62 = scmp.eq.s32.totalorder %s28, 0
      %p63 = por %p61, %p62
      %p64 = scmp.ne.s32.totalorder %s50, %s51
      %p65 = scmp.eq.s32.totalorder %s29, 3
      %p66 = por %p64, %p65
      %p68 = scmp.ne.s32.totalorder %s51, %s67
      %p69 = scmp.eq.s32.totalorder %s29, 0
      %p70 = por %p68, %p69
      %s72 = sadd.s32 %s71, 1
      %p75 = scmp.eq.s32.totalorder %s23, 3
      %p76 = scmp.ne.s32.totalorder %s71, %s73
      %p77 = scmp.eq.s32.totalorder %s23, 0
      %p78 = por %p76, %p77
      %p79 = scmp.ne.s32.totalorder %s71, %s73
      %p80 = scmp.eq.s32.totalorder %s28, 3
      %p81 = por %p79, %p80
      %p82 = scmp.ne.s32.totalorder %s73, %s74
      %p83 = scmp.eq.s32.totalorder %s28, 0
      %p84 = por %p82, %p83
      %p85 = scmp.ne.s32.totalorder %s73, %s74
      %p86 = scmp.eq.s32.totalorder %s29, 3
      %p87 = por %p85, %p86
      %p89 = scmp.ne.s32.totalorder %s74, %s88
      %p90 = scmp.eq.s32.totalorder %s29, 0
      %p91 = por %p89, %p90
      %s93 = sadd.s32 %s92, 1
      %p96 = scmp.eq.s32.totalorder %s23, 3
      %p97 = scmp.ne.s32.totalorder %s92, %s94
      %p98 = scmp.eq.s32.totalorder %s23, 0
      %p99 = por %p97, %p98
      %p100 = scmp.ne.s32.totalorder %s92, %s94
      %p101 = scmp.eq.s32.totalorder %s28, 3
      %p102 = por %p100, %p101
      %p103 = scmp.ne.s32.totalorder %s94, %s95
      %p104 = scmp.eq.s32.totalorder %s28, 0
      %p105 = por %p103, %p104
      %p106 = scmp.ne.s32.totalorder %s94, %s95
      %p107 = scmp.eq.s32.totalorder %s29, 3
      %p108 = por %p106, %p107
      %p110 = scmp.ne.s32.totalorder %s95, %s109
      %p111 = scmp.eq.s32.totalorder %s29, 0
      %p112 = por %p110, %p111
      %s114 = sadd.s32 %s113, 1
      %p117 = scmp.eq.s32.totalorder %s23, 3
      %p118 = scmp.ne.s32.totalorder %s113, %s115
      %p119 = scmp.eq.s32.totalorder %s23, 0
      %p120 = por %p118, %p119
      %p121 = scmp.ne.s32.totalorder %s113, %s115
      %p122 = scmp.eq.s32.totalorder %s28, 3
      %p123 = por %p121, %p122
      %p124 = scmp.ne.s32.totalorder %s115, %s116
      %p125 = scmp.eq.s32.totalorder %s28, 0
      %p126 = por %p124, %p125
      %p127 = scmp.ne.s32.totalorder %s115, %s116
      %p128 = scmp.eq.s32.totalorder %s29, 3
      %p129 = por %p127, %p128
      %p131 = scmp.ne.s32.totalorder %s116, %s130
      %p132 = scmp.eq.s32.totalorder %s29, 0
      %p133 = por %p131, %p132
      %s135 = sadd.s32 %s134, 1
      %p138 = scmp.eq.s32.totalorder %s23, 3
      %p139 = scmp.ne.s32.totalorder %s134, %s136
      %p140 = scmp.eq.s32.totalorder %s23, 0
      %p141 = por %p139, %p140
      %p142 = scmp.ne.s32.totalorder %s134, %s136
      %p143 = scmp.eq.s32.totalorder %s28, 3
      %p144 = por %p142, %p143
      %p145 = scmp.ne.s32.totalorder %s136, %s137
      %p146 = scmp.eq.s32.totalorder %s28, 0
      %p147 = por %p145, %p146
      %p148 = scmp.ne.s32.totalorder %s136, %s137
      %p149 = scmp.eq.s32.totalorder %s29, 3
      %p150 = por %p148, %p149
      %p152 = scmp.ne.s32.totalorder %s137, %s151
      %p153 = scmp.eq.s32.totalorder %s29, 0
      %p154 = por %p152, %p153
      %s156 = sadd.s32 %s155, 1
      %p159 = scmp.eq.s32.totalorder %s23, 3
      %p160 = scmp.ne.s32.totalorder %s155, %s157
      %p161 = scmp.eq.s32.totalorder %s23, 0
      %p162 = por %p160, %p161
      %p163 = scmp.ne.s32.totalorder %s155, %s157
      %p164 = scmp.eq.s32.totalorder %s28, 3
      %p165 = por %p163, %p164
      %p166 = scmp.ne.s32.totalorder %s157, %s158
      %p167 = scmp.eq.s32.totalorder %s28, 0
      %p168 = por %p166, %p167
      %p169 = scmp.ne.s32.totalorder %s157, %s158
      %p170 = scmp.eq.s32.totalorder %s29, 3
      %p171 = por %p169, %p170
      %p173 = scmp.ne.s32.totalorder %s158, %s172
      %p174 = scmp.eq.s32.totalorder %s29, 0
      %p175 = por %p173, %p174
      %s177 = sadd.s32 %s176, 1
      %p180 = scmp.eq.s32.totalorder %s23, 3
      %p181 = scmp.ne.s32.totalorder %s176, %s178
      %p182 = scmp.eq.s32.totalorder %s23, 0
      %p183 = por %p181, %p182
      %p184 = scmp.ne.s32.totalorder %s176, %s178
      %p185 = scmp.eq.s32.totalorder %s28, 3
      %p186 = por %p184, %p185
      %p187 = scmp.ne.s32.totalorder %s178, %s179
      %p188 = scmp.eq.s32.totalorder %s28, 0
      %p189 = por %p187, %p188
      %p190 = scmp.ne.s32.totalorder %s178, %s179
      %p191 = scmp.eq.s32.totalorder %s29, 3
      %p192 = por %p190, %p191
      %p194 = scmp.ne.s32.totalorder %s179, %s193
      %p195 = scmp.eq.s32.totalorder %s29, 0
      %p196 = por %p194, %p195
      %s198 = sadd.s32 %s197, 1
      %p201 = scmp.eq.s32.totalorder %s23, 3
      %p202 = scmp.ne.s32.totalorder %s197, %s199
      %p203 = scmp.eq.s32.totalorder %s23, 0
      %p204 = por %p202, %p203
      %p205 = scmp.ne.s32.totalorder %s197, %s199
      %p206 = scmp.eq.s32.totalorder %s28, 3
      %p207 = por %p205, %p206
      %p208 = scmp.ne.s32.totalorder %s199, %s200
      %p209 = scmp.eq.s32.totalorder %s28, 0
      %p210 = por %p208, %p209
      %p211 = scmp.ne.s32.totalorder %s199, %s200
      %p212 = scmp.eq.s32.totalorder %s29, 3
      %p213 = por %p211, %p212
      %p215 = scmp.ne.s32.totalorder %s200, %s214
      %p216 = scmp.eq.s32.totalorder %s29, 0
      %p217 = por %p215, %p216
      %s218 = ssub.s32 %s30, %s42
      %s219 = ssub.s32 %s31, %s38
      %s220 = sor.u32 %s218, %s219
      %p221 = scmp.eq.s32.totalorder %s220, 0
      %s223 = sadd.s32 %s222, 1
      %s224 = scalar_select %p221, %s222, %s223
      %p227 = pneg %p221
      %p228 = scmp.eq.s32.totalorder %s23, 3
      %p229 = por %p227, %p228
      %p230 = scmp.ne.s32.totalorder %s222, %s225
      %p231 = scmp.eq.s32.totalorder %s23, 0
      %p232 = por %p230, %p231
      %p233 = scmp.ne.s32.totalorder %s222, %s225
      %p234 = scmp.eq.s32.totalorder %s28, 3
      %p235 = por %p233, %p234
      %p236 = scmp.ne.s32.totalorder %s225, %s226
      %p237 = scmp.eq.s32.totalorder %s28, 0
      %p238 = por %p236, %p237
      %p239 = scmp.ne.s32.totalorder %s225, %s226
      %p240 = scmp.eq.s32.totalorder %s29, 3
      %p241 = por %p239, %p240
      %p243 = scmp.ne.s32.totalorder %s226, %s242
      %p244 = scmp.eq.s32.totalorder %s29, 0
      %p245 = por %p243, %p244
      %p246 = scmp.le.s32.totalorder 1, %s23
      %p247 = scmp.lt.s32.totalorder %s23, 5
      %p248 = pnand %p246, %p247
      %p249 = pneg %p248
      // Predicated region
      $region9: #{tpu_custom_call.1} parent=5 // pred_check
        _
      $region10: #{tpu_custom_call.1} parent=5 // pred_check_branch
        %251 = sbr.rel (%p248) target = $region12
      $region11: #{tpu_custom_call.1} parent=5 // pred_region
        %s252 = ssub.s32 %s23, 1
        // Predicated region
        $region13: #{tpu_custom_call.1} parent=11 // pred_check
          %p253 = pneg %p84
        $region14: #{tpu_custom_call.1} parent=11 // pred_check_branch
          %255 = sbr.rel (%p253) target = $region16
        $region15: #{tpu_custom_call.1} parent=11 // pred_region
          %s257 = ssub.s32 1024, 1024
          %258 = vsyncadd [#allocation8], %s257
          %s259 = sshll.u32 [#allocation7], 4
          %s260 = int_to_ptr.vmem [resolvable:$true] %s259
          %265 = dma.hbm_to_vmem [thread:$0]  %s2, 1024, %s260, [#allocation8], 64, 64, 4
        $region16: #{tpu_custom_call.1} parent=11 // pred_fallthru
          _
        // Predicated region
        $region17: #{tpu_custom_call.1} parent=11 // pred_check
          %p266 = pneg %p105
        $region18: #{tpu_custom_call.1} parent=11 // pred_check_branch
          %268 = sbr.rel (%p266) target = $region20
        $region19: #{tpu_custom_call.1} parent=11 // pred_region
          %s270 = ssub.s32 1024, 1024
          %271 = vsyncadd [#allocation8], %s270
          %s272 = sshll.u32 [#allocation9], 4
          %s273 = int_to_ptr.vmem [resolvable:$true] %s272
          %278 = dma.hbm_to_vmem [thread:$0]  %s3, 1024, %s273, [#allocation8], 64, 64, 4
        $region20: #{tpu_custom_call.1} parent=11 // pred_fallthru
          _
        // Predicated region
        $region21: #{tpu_custom_call.1} parent=11 // pred_check
          %p279 = pneg %p126
        $region22: #{tpu_custom_call.1} parent=11 // pred_check_branch
          %281 = sbr.rel (%p279) target = $region24
        $region23: #{tpu_custom_call.1} parent=11 // pred_region
          _
        $region24: #{tpu_custom_call.1} parent=11 // pred_fallthru
          _
        // Predicated region
        $region25: #{tpu_custom_call.1} parent=11 // pred_check
          %p282 = pneg %p147
        $region26: #{tpu_custom_call.1} parent=11 // pred_check_branch
          %284 = sbr.rel (%p282) target = $region28
        $region27: #{tpu_custom_call.1} parent=11 // pred_region
          _
        $region28: #{tpu_custom_call.1} parent=11 // pred_fallthru
          _
        // Predicated region
        $region29: #{tpu_custom_call.1} parent=11 // pred_check
          %p285 = pneg %p168
        $region30: #{tpu_custom_call.1} parent=11 // pred_check_branch
          %287 = sbr.rel (%p285) target = $region32
        $region31: #{tpu_custom_call.1} parent=11 // pred_region
          _
        $region32: #{tpu_custom_call.1} parent=11 // pred_fallthru
          _
        // Predicated region
        $region33: #{tpu_custom_call.1} parent=11 // pred_check
          %p288 = pneg %p189
        $region34: #{tpu_custom_call.1} parent=11 // pred_check_branch
          %290 = sbr.rel (%p288) target = $region36
        $region35: #{tpu_custom_call.1} parent=11 // pred_region
          %s292 = ssub.s32 1024, 1024
          %293 = vsyncadd [#allocation11], %s292
          %s294 = sshll.u32 [#allocation10], 4
          %s295 = int_to_ptr.vmem [resolvable:$true] %s294
          %300 = dma.hbm_to_vmem [thread:$0]  %s7, 1024, %s295, [#allocation11], 64, 64, 4
        $region36: #{tpu_custom_call.1} parent=11 // pred_fallthru
          _
        // Predicated region
        $region37: #{tpu_custom_call.1} parent=11 // pred_check
          %p301 = pneg %p210
        $region38: #{tpu_custom_call.1} parent=11 // pred_check_branch
          %303 = sbr.rel (%p301) target = $region40
        $region39: #{tpu_custom_call.1} parent=11 // pred_region
          _
        $region40: #{tpu_custom_call.1} parent=11 // pred_fallthru
          _
      $region12: #{tpu_custom_call.1} parent=5 // pred_fallthru
        _
      %p304 = scmp.lt.s32.totalorder %s23, 4
      // Predicated region
      $region41: #{tpu_custom_call.1} parent=5 // pred_check
        %p305 = pneg %p304
      $region42: #{tpu_custom_call.1} parent=5 // pred_check_branch
        %307 = sbr.rel (%p305) target = $region44
      $region43: #{tpu_custom_call.1} parent=5 // pred_region
        // Predicated region
        $region45: #{tpu_custom_call.1} parent=43 // pred_check
          %p308 = pneg %p57
        $region46: #{tpu_custom_call.1} parent=43 // pred_check_branch
          %310 = sbr.rel (%p308) target = $region48
        $region47: #{tpu_custom_call.1} parent=43 // pred_region
          %s311 = sand.u32 %s47, 1
          %s312 = scalar_lea.sflag [#allocation5], %s311
          %s313 = sand.u32 %s47, 1
          %s314 = smul.addr %s313, 32
          %s315 = scalar_lea.vmem [#allocation4], %s314
          %s316 = smul.u32 4, %s31
          %s318 = ssub.s32 512, 512
          %319 = vsyncadd %s312, %s318
          %s320 = smul.addr %s30, 8
          %s321 = sadd.s32 %s316, %s320
          %s322 = smul.addr %s321, 128
          %s323 = scalar_lea.hbm %s0, %s322
          %s324 = sshll.u32 %s315, 4
          %s325 = int_to_ptr.vmem [resolvable:$true] %s324
          %330 = dma.hbm_to_vmem [thread:$0]  %s323, 512, %s325, %s312, 128, 128, 8
        $region48: #{tpu_custom_call.1} parent=43 // pred_fallthru
          _
      $region44: #{tpu_custom_call.1} parent=5 // pred_fallthru
        _
      %p331 = scmp.le.s32.totalorder 1, %s23
      %p332 = scmp.lt.s32.totalorder %s23, 5
      %p333 = pnand %p331, %p332
      %p334 = pneg %p333
      // Predicated region
      $region49: #{tpu_custom_call.1} parent=5 // pred_check
        _
      $region50: #{tpu_custom_call.1} parent=5 // pred_check_branch
        %336 = sbr.rel (%p333) target = $region52
      $region51: #{tpu_custom_call.1} parent=5 // pred_region
        %s337 = ssub.s32 %s23, 1
        %s338 = sand.u32 %s50, 1
        %s339 = scalar_lea.sflag [#allocation5], %s338
        %s340 = sand.u32 %s50, 1
        %s341 = smul.addr %s340, 32
        %s342 = scalar_lea.vmem [#allocation4], %s341
        // Predicated region
        $region53: #{tpu_custom_call.1} parent=51 // pred_check
          %p343 = pneg %p63
        $region54: #{tpu_custom_call.1} parent=51 // pred_check_branch
          %345 = sbr.rel (%p343) target = $region56
        $region55: #{tpu_custom_call.1} parent=51 // pred_region
          %346 = dma.done %s339, 512
        $region56: #{tpu_custom_call.1} parent=51 // pred_fallthru
          _
        // Predicated region
        $region57: #{tpu_custom_call.1} parent=51 // pred_check
          %p347 = pneg %p84
        $region58: #{tpu_custom_call.1} parent=51 // pred_check_branch
          %349 = sbr.rel (%p347) target = $region60
        $region59: #{tpu_custom_call.1} parent=51 // pred_region
          %350 = dma.done [#allocation8], 1024
        $region60: #{tpu_custom_call.1} parent=51 // pred_fallthru
          _
        // Predicated region
        $region61: #{tpu_custom_call.1} parent=51 // pred_check
          %p351 = pneg %p105
        $region62: #{tpu_custom_call.1} parent=51 // pred_check_branch
          %353 = sbr.rel (%p351) target = $region64
        $region63: #{tpu_custom_call.1} parent=51 // pred_region
          %354 = dma.done [#allocation8], 1024
        $region64: #{tpu_custom_call.1} parent=51 // pred_fallthru
          _
        // Predicated region
        $region65: #{tpu_custom_call.1} parent=51 // pred_check
          %p355 = pneg %p189
        $region66: #{tpu_custom_call.1} parent=51 // pred_check_branch
          %357 = sbr.rel (%p355) target = $region68
        $region67: #{tpu_custom_call.1} parent=51 // pred_region
          %358 = dma.done [#allocation11], 1024
        $region68: #{tpu_custom_call.1} parent=51 // pred_fallthru
          _
        %s359 = sand.u32 %s50, 1
        %s360 = scalar_lea.sflag [#allocation5], %s359
        %s361 = sand.u32 %s50, 1
        %s362 = smul.addr %s361, 32
        %s363 = scalar_lea.vmem [#allocation4], %s362
        %p364 = pneg %p63
        %p365 = pneg %p60
        %p366 = pneg %p84
        %p367 = pneg %p81
        %p368 = pneg %p105
        %p369 = pneg %p102
        %p370 = pneg %p126
        %p371 = pneg %p123
        %p372 = pneg %p147
        %p373 = pneg %p144
        %p374 = pneg %p168
        %p375 = pneg %p165
        %p376 = pneg %p189
        %p377 = pneg %p186
        %p378 = pneg %p210
        %p379 = pneg %p207
        %p380 = pneg %p238
        %p381 = pneg %p235
        %s382 = sand.u32 %s225, 1
        %s383 = scalar_lea.sflag [#allocation6], %s382
        %s384 = sand.u32 %s225, 1
        %s385 = smul.addr %s384, 32
        %s386 = scalar_lea.vmem [#allocation12], %s385
        %s387 = smul.u32 4, %s33
        %s388 = smul.u32 4, %s33
        %s390 = smul.u32 %s33, 32
        %s391 = sshra.s32 %s390, 3
        %s392 = sand.u32 %s390, 7
        %s393 = smul.u32 %s32, 10
        %s394 = sadd.s32 %s391, %s393
        %s395 = smul.addr %s394, 64
        %s396 = scalar_lea.hbm %s1, %s395
        // Predicated region
        $region69: #{tpu_custom_call.1} parent=51 // pred_check
          _
        $region70: #{tpu_custom_call.1} parent=51 // pred_check_branch
          %398 = sbr.rel target = $region72
        $region71: #{tpu_custom_call.1} parent=51 // pred_region
          %399 = sst [smem:[#allocation15]] [#allocation14]
          %400 = sst [smem:[#allocation16]] [#allocation13]
        $region72: #{tpu_custom_call.1} parent=51 // pred_fallthru
          _
        %402 = shalt.err (0)
        %s404 = sshll.u32 [#allocation2], 4
        %s405 = int_to_ptr.vmem [resolvable:$true] %s404
        %407 = dma.hbm_to_vmem [thread:$0]  %s396, 384, %s405, [#allocation3]
        %s408 = smul.u32 4, 6
        %s409 = smul.u32 %s408, 1
        %s410 = sshll.u32 %s409, 4
        %411 = dma.done [#allocation3], %s410
        %v412 = vld [vmem:[#allocation2] sm:$0xff]
        %v413 = vld [vmem:[#allocation2 + $0x8] sm:$0xff]
        %v414 = vld [vmem:[#allocation2 + $0x10] sm:$0xff]
        %v415 = vld [vmem:[#allocation7] sm:$0xf]
        %v416 = vld [vmem:[#allocation7 + $0x4] sm:$0xf]
        %v417 = vld [vmem:[#allocation7 + $0x8] sm:$0xf]
        %v418 = vld [vmem:[#allocation7 + $0xc] sm:$0xf]
        %v419 = vld [vmem:[#allocation7 + $0x10] sm:$0xf]
        %v420 = vld [vmem:[#allocation7 + $0x14] sm:$0xf]
        %v421 = vld [vmem:[#allocation7 + $0x18] sm:$0xf]
        %v422 = vld [vmem:[#allocation7 + $0x1c] sm:$0xf]
        %v423 = vld [vmem:[#allocation7 + $0x20] sm:$0xf]
        %v424 = vld [vmem:[#allocation7 + $0x24] sm:$0xf]
        %v425 = vld [vmem:[#allocation7 + $0x28] sm:$0xf]
        %v426 = vld [vmem:[#allocation7 + $0x2c] sm:$0xf]
        %v427 = vld [vmem:[#allocation7 + $0x30] sm:$0xf]
        %v428 = vld [vmem:[#allocation7 + $0x34] sm:$0xf]
        %v429 = vld [vmem:[#allocation7 + $0x38] sm:$0xf]
        %v430 = vld [vmem:[#allocation7 + $0x3c] sm:$0xf]
        %v447 = vunpack.c.l.b16 %v415
        %v448 = vunpack.c.l.b16 %v416
        %v449 = vunpack.c.l.b16 %v417
        %v450 = vunpack.c.l.b16 %v418
        %v451 = vunpack.c.l.b16 %v419
        %v452 = vunpack.c.l.b16 %v420
        %v453 = vunpack.c.l.b16 %v421
        %v454 = vunpack.c.l.b16 %v422
        %v455 = vunpack.c.l.b16 %v423
        %v456 = vunpack.c.l.b16 %v424
        %v457 = vunpack.c.l.b16 %v425
        %v458 = vunpack.c.l.b16 %v426
        %v459 = vunpack.c.l.b16 %v427
        %v460 = vunpack.c.l.b16 %v428
        %v461 = vunpack.c.l.b16 %v429
        %v462 = vunpack.c.l.b16 %v430
        %v463 = vpack.c.b16 %v448, %v447
        %v464 = vpack.c.b16 %v450, %v449
        %v465 = vpack.c.b16 %v452, %v451
        %v466 = vpack.c.b16 %v454, %v453
        %v467 = vpack.c.b16 %v456, %v455
        %v468 = vpack.c.b16 %v458, %v457
        %v469 = vpack.c.b16 %v460, %v459
        %v470 = vpack.c.b16 %v462, %v461
        %479 = vmatprep.subr.bf16.mxu0 0
        %480 = vmatpush1.bf16.msra.mxu0 %v463
        %481 = vmatprep.subr.bf16.mxu0 0
        %482 = vmatpush1.bf16.msra.mxu0 %v464
        %483 = vmatprep.subr.bf16.mxu0 0
        %484 = vmatpush1.bf16.msra.mxu0 %v465
        %485 = vmatprep.subr.bf16.mxu0 0
        %486 = vmatpush1.bf16.msra.mxu0 %v466
        %487 = vmatprep.subr.bf16.mxu0 0
        %488 = vmatpush1.bf16.msra.mxu0 %v467
        %489 = vmatprep.subr.bf16.mxu0 0
        %490 = vmatpush1.bf16.msra.mxu0 %v468
        %491 = vmatprep.subr.bf16.mxu0 0
        %492 = vmatpush1.bf16.msra.mxu0 %v469
        %493 = vmatprep.subr.bf16.mxu0 0
        %494 = vmatpush1.bf16.msra.mxu0 %v470
        %495 = vmatprep.subr.bf16.mxu0 0
        %496 = vmatpush1.bf16.msra.mxu0 0
        %497 = vmatprep.subr.bf16.mxu0 0
        %498 = vmatpush1.bf16.msra.mxu0 0
        %499 = vmatprep.subr.bf16.mxu0 0
        %500 = vmatpush1.bf16.msra.mxu0 0
        %501 = vmatprep.subr.bf16.mxu0 0
        %502 = vmatpush1.bf16.msra.mxu0 0
        %503 = vmatprep.subr.bf16.mxu0 0
        %504 = vmatpush1.bf16.msra.mxu0 0
        %505 = vmatprep.subr.bf16.mxu0 0
        %506 = vmatpush1.bf16.msra.mxu0 0
        %507 = vmatprep.subr.bf16.mxu0 0
        %508 = vmatpush1.bf16.msra.mxu0 0
        %509 = vmatprep.subr.bf16.mxu0 0
        %510 = vmatpush1.bf16.msra.mxu0 0
        %511 = vmatprep.mubr.bf16.mxu0 0
        %512 = vmatmul.mubr.bf16.gmra.mrb[0].mxu0 %v412
        %v513 = vpop.f32.mrb[0].mxu0
        %v514 = vadd.f32 0.0, %v513
        %v515 = vpop.f32.mrb[0].mxu0
        %v516 = vpop.f32.mrb[0].mxu0
        %v517 = vadd.f32 0.0, %v516
        %v518 = vpop.f32.mrb[0].mxu0
        %519 = vmatprep.mubr.bf16.mxu0 0
        %520 = vmatmul.mubr.bf16.gmra.mrb[0].mxu0 %v413
        %v521 = vpop.f32.mrb[0].mxu0
        %v522 = vadd.f32 0.0, %v521
        %v523 = vpop.f32.mrb[0].mxu0
        %v524 = vpop.f32.mrb[0].mxu0
        %v525 = vadd.f32 0.0, %v524
        %v526 = vpop.f32.mrb[0].mxu0
        %527 = vmatprep.mubr.bf16.mxu0 0
        %528 = vmatmul.mubr.bf16.gmra.mrb[0].mxu0 %v414
        %v529 = vpop.f32.mrb[0].mxu0
        %v530 = vadd.f32 0.0, %v529
        %v531 = vpop.f32.mrb[0].mxu0
        %v532 = vpop.f32.mrb[0].mxu0
        %v533 = vpop.f32.mrb[0].mxu0
        %534 = vdwg.mxu0
        %v535 = vld [vmem:[#allocation9] sm:$0xf]
        %v536 = vld [vmem:[#allocation9 + $0x4] sm:$0xf]
        %v537 = vld [vmem:[#allocation9 + $0x8] sm:$0xf]
        %v538 = vld [vmem:[#allocation9 + $0xc] sm:$0xf]
        %v539 = vld [vmem:[#allocation9 + $0x10] sm:$0xf]
        %v540 = vld [vmem:[#allocation9 + $0x14] sm:$0xf]
        %v541 = vld [vmem:[#allocation9 + $0x18] sm:$0xf]
        %v542 = vld [vmem:[#allocation9 + $0x1c] sm:$0xf]
        %v543 = vld [vmem:[#allocation9 + $0x20] sm:$0xf]
        %v544 = vld [vmem:[#allocation9 + $0x24] sm:$0xf]
        %v545 = vld [vmem:[#allocation9 + $0x28] sm:$0xf]
        %v546 = vld [vmem:[#allocation9 + $0x2c] sm:$0xf]
        %v547 = vld [vmem:[#allocation9 + $0x30] sm:$0xf]
        %v548 = vld [vmem:[#allocation9 + $0x34] sm:$0xf]
        %v549 = vld [vmem:[#allocation9 + $0x38] sm:$0xf]
        %v550 = vld [vmem:[#allocation9 + $0x3c] sm:$0xf]
        %v567 = vunpack.c.l.b16 %v535
        %v568 = vunpack.c.l.b16 %v536
        %v569 = vunpack.c.l.b16 %v537
        %v570 = vunpack.c.l.b16 %v538
        %v571 = vunpack.c.l.b16 %v539
        %v572 = vunpack.c.l.b16 %v540
        %v573 = vunpack.c.l.b16 %v541
        %v574 = vunpack.c.l.b16 %v542
        %v575 = vunpack.c.l.b16 %v543
        %v576 = vunpack.c.l.b16 %v544
        %v577 = vunpack.c.l.b16 %v545
        %v578 = vunpack.c.l.b16 %v546
        %v579 = vunpack.c.l.b16 %v547
        %v580 = vunpack.c.l.b16 %v548
        %v581 = vunpack.c.l.b16 %v549
        %v582 = vunpack.c.l.b16 %v550
        %v583 = vpack.c.b16 %v568, %v567
        %v584 = vpack.c.b16 %v570, %v569
        %v585 = vpack.c.b16 %v572, %v571
        %v586 = vpack.c.b16 %v574, %v573
        %v587 = vpack.c.b16 %v576, %v575
        %v588 = vpack.c.b16 %v578, %v577
        %v589 = vpack.c.b16 %v580, %v579
        %v590 = vpack.c.b16 %v582, %v581
        %599 = vmatprep.subr.bf16.mxu0 0
        %600 = vmatpush1.bf16.msra.mxu0 %v583
        %601 = vmatprep.subr.bf16.mxu0 0
        %602 = vmatpush1.bf16.msra.mxu0 %v584
        %603 = vmatprep.subr.bf16.mxu0 0
        %604 = vmatpush1.bf16.msra.mxu0 %v585
        %605 = vmatprep.subr.bf16.mxu0 0
        %606 = vmatpush1.bf16.msra.mxu0 %v586
        %607 = vmatprep.subr.bf16.mxu0 0
        %608 = vmatpush1.bf16.msra.mxu0 %v587
        %609 = vmatprep.subr.bf16.mxu0 0
        %610 = vmatpush1.bf16.msra.mxu0 %v588
        %611 = vmatprep.subr.bf16.mxu0 0
        %612 = vmatpush1.bf16.msra.mxu0 %v589
        %613 = vmatprep.subr.bf16.mxu0 0
        %614 = vmatpush1.bf16.msra.mxu0 %v590
        %615 = vmatprep.subr.bf16.mxu0 0
        %616 = vmatpush1.bf16.msra.mxu0 0
        %617 = vmatprep.subr.bf16.mxu0 0
        %618 = vmatpush1.bf16.msra.mxu0 0
        %619 = vmatprep.subr.bf16.mxu0 0
        %620 = vmatpush1.bf16.msra.mxu0 0
        %621 = vmatprep.subr.bf16.mxu0 0
        %622 = vmatpush1.bf16.msra.mxu0 0
        %623 = vmatprep.subr.bf16.mxu0 0
        %624 = vmatpush1.bf16.msra.mxu0 0
        %625 = vmatprep.subr.bf16.mxu0 0
        %626 = vmatpush1.bf16.msra.mxu0 0
        %627 = vmatprep.subr.bf16.mxu0 0
        %628 = vmatpush1.bf16.msra.mxu0 0
        %629 = vmatprep.subr.bf16.mxu0 0
        %630 = vmatpush1.bf16.msra.mxu0 0
        %631 = vmatprep.mubr.bf16.mxu0 0
        %632 = vmatmul.mubr.bf16.gmra.mrb[0].mxu0 %v412
        %v633 = vpop.f32.mrb[0].mxu0
        %v634 = vadd.f32 0.0, %v633
        %v635 = vpop.f32.mrb[0].mxu0
        %v636 = vpop.f32.mrb[0].mxu0
        %v637 = vadd.f32 0.0, %v636
        %v638 = vpop.f32.mrb[0].mxu0
        %639 = vmatprep.mubr.bf16.mxu0 0
        %640 = vmatmul.mubr.bf16.gmra.mrb[0].mxu0 %v413
        %v641 = vpop.f32.mrb[0].mxu0
        %v642 = vadd.f32 0.0, %v641
        %v643 = vpop.f32.mrb[0].mxu0
        %v644 = vpop.f32.mrb[0].mxu0
        %v645 = vadd.f32 0.0, %v644
        %v646 = vpop.f32.mrb[0].mxu0
        %647 = vmatprep.mubr.bf16.mxu0 0
        %648 = vmatmul.mubr.bf16.gmra.mrb[0].mxu0 %v414
        %v649 = vpop.f32.mrb[0].mxu0
        %v650 = vadd.f32 0.0, %v649
        %v651 = vpop.f32.mrb[0].mxu0
        %v652 = vpop.f32.mrb[0].mxu0
        %v653 = vpop.f32.mrb[0].mxu0
        %654 = vdwg.mxu0
        %v655 = vxor.u32 %v634, 2147483648
        %v656 = vxor.u32 %v637, 2147483648
        %v657 = vxor.u32 %v642, 2147483648
        %v658 = vxor.u32 %v645, 2147483648
        %v659 = vxor.u32 %v650, 2147483648
        %v660 = vmul.f32 %v655, 1.442695
        %v661 = vpow.pop %v660
        %v662 = vmul.f32 %v656, 1.442695
        %v663 = vpow.pop %v662
        %v664 = vmul.f32 %v657, 1.442695
        %v665 = vpow.pop %v664
        %v666 = vmul.f32 %v658, 1.442695
        %v667 = vpow.pop %v666
        %v668 = vmul.f32 %v659, 1.442695
        %v669 = vpow.pop %v668
        %v670 = vadd.f32 %v661, 1.0
        %v671 = vadd.f32 %v663, 1.0
        %v672 = vadd.f32 %v665, 1.0
        %v673 = vadd.f32 %v667, 1.0
        %v674 = vadd.f32 %v669, 1.0
        %v675 = vrcp.pop %v670
        %v676 = vmul.f32 1.0, %v675
        %v677 = vrcp.pop %v671
        %v678 = vmul.f32 1.0, %v677
        %v679 = vrcp.pop %v672
        %v680 = vmul.f32 1.0, %v679
        %v681 = vrcp.pop %v673
        %v682 = vmul.f32 1.0, %v681
        %v683 = vrcp.pop %v674
        %v684 = vmul.f32 1.0, %v683
        %v685 = vmul.f32 %v514, %v676
        %v686 = vmul.f32 %v517, %v678
        %v687 = vmul.f32 %v522, %v680
        %v688 = vmul.f32 %v525, %v682
        %v689 = vmul.f32 %v530, %v684
        %v690 = vld [vmem:[%s4] sm:$0x1f]
        %v691 = vlaneseq
        %v692 = vshrl.u32 %v691, 7
        %v693 = vsub.s32 0, %v692
        %v694 = vrot.slane %v690, %v693
        %v695 = vmul.f32 %v685, %v694
        %v696 = vmul.f32 %v686, %v694
        %v697 = vmul.f32 %v687, %v694
        %v698 = vmul.f32 %v688, %v694
        %v699 = vrot.slane %v685, 1
        %v700 = vrot.slane %v686, 1
        %v701 = vrot.slane %v687, 1
        %v702 = vrot.slane %v688, 1
        %v703 = vrot.slane %v689, 1
        %v704 = vlaneseq
        %v705 = vshrl.u32 %v704, 7
        %vm706 = vcmp.lt.s32.totalorder %v705, 7
        %v707 = vsel %vm706, %v702, %v703
        %v708 = vsel %vm706, %v701, %v702
        %v709 = vsel %vm706, %v700, %v701
        %v710 = vsel %vm706, %v699, %v700
        %v711 = vlaneseq
        %v712 = vshrl.u32 %v711, 7
        %v713 = vsub.s32 1, %v712
        %v714 = vrot.slane %v690, %v713
        %v715 = vmul.f32 %v710, %v714
        %v716 = vmul.f32 %v709, %v714
        %v717 = vmul.f32 %v708, %v714
        %v718 = vmul.f32 %v707, %v714
        %v719 = vadd.f32 %v695, %v715
        %v720 = vadd.f32 %v696, %v716
        %v721 = vadd.f32 %v697, %v717
        %v722 = vadd.f32 %v698, %v718
        %v723 = vrot.slane %v685, 2
        %v724 = vrot.slane %v686, 2
        %v725 = vrot.slane %v687, 2
        %v726 = vrot.slane %v688, 2
        %v727 = vrot.slane %v689, 2
        %vm728 = vcmp.lt.s32.totalorder %v705, 6
        %v729 = vsel %vm728, %v726, %v727
        %v730 = vsel %vm728, %v725, %v726
        %v731 = vsel %vm728, %v724, %v725
        %v732 = vsel %vm728, %v723, %v724
        %v733 = vlaneseq
        %v734 = vshrl.u32 %v733, 7
        %v735 = vsub.s32 2, %v734
        %v736 = vrot.slane %v690, %v735
        %v737 = vmul.f32 %v732, %v736
        %v738 = vmul.f32 %v731, %v736
        %v739 = vmul.f32 %v730, %v736
        %v740 = vmul.f32 %v729, %v736
        %v741 = vadd.f32 %v719, %v737
        %v742 = vadd.f32 %v720, %v738
        %v743 = vadd.f32 %v721, %v739
        %v744 = vadd.f32 %v722, %v740
        %v745 = vrot.slane %v685, 3
        %v746 = vrot.slane %v686, 3
        %v747 = vrot.slane %v687, 3
        %v748 = vrot.slane %v688, 3
        %v749 = vrot.slane %v689, 3
        %vm750 = vcmp.lt.s32.totalorder %v705, 5
        %v751 = vsel %vm750, %v748, %v749
        %v752 = vsel %vm750, %v747, %v748
        %v753 = vsel %vm750, %v746, %v747
        %v754 = vsel %vm750, %v745, %v746
        %v755 = vlaneseq
        %v756 = vshrl.u32 %v755, 7
        %v757 = vsub.s32 3, %v756
        %v758 = vrot.slane %v690, %v757
        %v759 = vmul.f32 %v754, %v758
        %v760 = vmul.f32 %v753, %v758
        %v761 = vmul.f32 %v752, %v758
        %v762 = vmul.f32 %v751, %v758
        %v763 = vadd.f32 %v741, %v759
        %v764 = vadd.f32 %v742, %v760
        %v765 = vadd.f32 %v743, %v761
        %v766 = vadd.f32 %v744, %v762
        %v767 = vrot.slane %v685, 4
        %v768 = vrot.slane %v686, 4
        %v769 = vrot.slane %v687, 4
        %v770 = vrot.slane %v688, 4
        %v771 = vrot.slane %v689, 4
        %vm772 = vcmp.lt.s32.totalorder %v705, 4
        %v773 = vsel %vm772, %v770, %v771
        %v774 = vsel %vm772, %v769, %v770
        %v775 = vsel %vm772, %v768, %v769
        %v776 = vsel %vm772, %v767, %v768
        %v777 = vlaneseq
        %v778 = vshrl.u32 %v777, 7
        %v779 = vsub.s32 4, %v778
        %v780 = vrot.slane %v690, %v779
        %v781 = vmul.f32 %v776, %v780
        %v782 = vmul.f32 %v775, %v780
        %v783 = vmul.f32 %v774, %v780
        %v784 = vmul.f32 %v773, %v780
        %v785 = vadd.f32 %v763, %v781
        %v786 = vadd.f32 %v764, %v782
        %v787 = vadd.f32 %v765, %v783
        %v788 = vadd.f32 %v766, %v784
        %v789 = vld [vmem:[%s5] sm:$0x1]
        %v791 = vlaneseq
        %v792 = vshrl.u32 %v791, 7
        %v793 = vsub.s32 0, %v792
        %v794 = vrot.slane %v789, %v793
        %v796 = vmul.f32 %v785, %v794
        %v797 = vmul.f32 %v786, %v794
        %v798 = vmul.f32 %v787, %v794
        %v799 = vmul.f32 %v788, %v794
        %v800 = vld [vmem:[%s6] sm:$0x1]
        %v802 = vlaneseq
        %v803 = vshrl.u32 %v802, 7
        %v804 = vsub.s32 0, %v803
        %v805 = vrot.slane %v800, %v804
        %v807 = vadd.f32 %v796, %v805
        %v808 = vadd.f32 %v797, %v805
        %v809 = vadd.f32 %v798, %v805
        %v810 = vadd.f32 %v799, %v805
        %v811 = vxor.u32 %v807, 2147483648
        %v812 = vxor.u32 %v808, 2147483648
        %v813 = vxor.u32 %v809, 2147483648
        %v814 = vxor.u32 %v810, 2147483648
        %v815 = vmul.f32 %v811, 1.442695
        %v816 = vpow.pop %v815
        %v817 = vmul.f32 %v812, 1.442695
        %v818 = vpow.pop %v817
        %v819 = vmul.f32 %v813, 1.442695
        %v820 = vpow.pop %v819
        %v821 = vmul.f32 %v814, 1.442695
        %v822 = vpow.pop %v821
        %v823 = vadd.f32 %v816, 1.0
        %v824 = vadd.f32 %v818, 1.0
        %v825 = vadd.f32 %v820, 1.0
        %v826 = vadd.f32 %v822, 1.0
        %v827 = vrcp.pop %v823
        %v828 = vmul.f32 1.0, %v827
        %v829 = vrcp.pop %v824
        %v830 = vmul.f32 1.0, %v829
        %v831 = vrcp.pop %v825
        %v832 = vmul.f32 1.0, %v831
        %v833 = vrcp.pop %v826
        %v834 = vmul.f32 1.0, %v833
        %v835 = vmul.f32 %v807, %v828
        %v836 = vmul.f32 %v808, %v830
        %v837 = vmul.f32 %v809, %v832
        %v838 = vmul.f32 %v810, %v834
        %v839 = vpack.c.bf16 %v836, %v835
        %v840 = vpack.c.bf16 %v838, %v837
        %v841 = vld [vmem:[#allocation10] sm:$0xf]
        %v842 = vld [vmem:[#allocation10 + $0x4] sm:$0xf]
        %v843 = vld [vmem:[#allocation10 + $0x8] sm:$0xf]
        %v844 = vld [vmem:[#allocation10 + $0xc] sm:$0xf]
        %v845 = vld [vmem:[#allocation10 + $0x10] sm:$0xf]
        %v846 = vld [vmem:[#allocation10 + $0x14] sm:$0xf]
        %v847 = vld [vmem:[#allocation10 + $0x18] sm:$0xf]
        %v848 = vld [vmem:[#allocation10 + $0x1c] sm:$0xf]
        %v849 = vld [vmem:[#allocation10 + $0x20] sm:$0xf]
        %v850 = vld [vmem:[#allocation10 + $0x24] sm:$0xf]
        %v851 = vld [vmem:[#allocation10 + $0x28] sm:$0xf]
        %v852 = vld [vmem:[#allocation10 + $0x2c] sm:$0xf]
        %v853 = vld [vmem:[#allocation10 + $0x30] sm:$0xf]
        %v854 = vld [vmem:[#allocation10 + $0x34] sm:$0xf]
        %v855 = vld [vmem:[#allocation10 + $0x38] sm:$0xf]
        %v856 = vld [vmem:[#allocation10 + $0x3c] sm:$0xf]
        %v857 = vld [vmem:[%s8] sm:$0x1]
        %v859 = vlaneseq
        %v860 = vshrl.u32 %v859, 7
        %v861 = vsub.s32 0, %v860
        %v862 = vrot.slane %v857, %v861
        %v880 = vunpack.c.l.b16 %v841
        %v881 = vunpack.c.l.b16 %v842
        %v882 = vunpack.c.l.b16 %v843
        %v883 = vunpack.c.l.b16 %v844
        %v884 = vunpack.c.l.b16 %v845
        %v885 = vunpack.c.l.b16 %v846
        %v886 = vunpack.c.l.b16 %v847
        %v887 = vunpack.c.l.b16 %v848
        %v888 = vunpack.c.l.b16 %v849
        %v889 = vunpack.c.l.b16 %v850
        %v890 = vunpack.c.l.b16 %v851
        %v891 = vunpack.c.l.b16 %v852
        %v892 = vunpack.c.l.b16 %v853
        %v893 = vunpack.c.l.b16 %v854
        %v894 = vunpack.c.l.b16 %v855
        %v895 = vunpack.c.l.b16 %v856
        %v896 = vpack.c.b16 %v881, %v880
        %v897 = vpack.c.b16 %v883, %v882
        %v898 = vpack.c.b16 %v885, %v884
        %v899 = vpack.c.b16 %v887, %v886
        %v900 = vpack.c.b16 %v889, %v888
        %v901 = vpack.c.b16 %v891, %v890
        %v902 = vpack.c.b16 %v893, %v892
        %v903 = vpack.c.b16 %v895, %v894
        %912 = vmatprep.subr.bf16.mxu0 0
        %913 = vmatpush1.bf16.msra.mxu0 %v896
        %914 = vmatprep.subr.bf16.mxu0 0
        %915 = vmatpush1.bf16.msra.mxu0 %v897
        %916 = vmatprep.subr.bf16.mxu0 0
        %917 = vmatpush1.bf16.msra.mxu0 %v898
        %918 = vmatprep.subr.bf16.mxu0 0
        %919 = vmatpush1.bf16.msra.mxu0 %v899
        %920 = vmatprep.subr.bf16.mxu0 0
        %921 = vmatpush1.bf16.msra.mxu0 %v900
        %922 = vmatprep.subr.bf16.mxu0 0
        %923 = vmatpush1.bf16.msra.mxu0 %v901
        %924 = vmatprep.subr.bf16.mxu0 0
        %925 = vmatpush1.bf16.msra.mxu0 %v902
        %926 = vmatprep.subr.bf16.mxu0 0
        %927 = vmatpush1.bf16.msra.mxu0 %v903
        %928 = vmatprep.subr.bf16.mxu0 0
        %929 = vmatpush1.bf16.msra.mxu0 0
        %930 = vmatprep.subr.bf16.mxu0 0
        %931 = vmatpush1.bf16.msra.mxu0 0
        %932 = vmatprep.subr.bf16.mxu0 0
        %933 = vmatpush1.bf16.msra.mxu0 0
        %934 = vmatprep.subr.bf16.mxu0 0
        %935 = vmatpush1.bf16.msra.mxu0 0
        %936 = vmatprep.subr.bf16.mxu0 0
        %937 = vmatpush1.bf16.msra.mxu0 0
        %938 = vmatprep.subr.bf16.mxu0 0
        %939 = vmatpush1.bf16.msra.mxu0 0
        %940 = vmatprep.subr.bf16.mxu0 0
        %941 = vmatpush1.bf16.msra.mxu0 0
        %942 = vmatprep.subr.bf16.mxu0 0
        %943 = vmatpush1.bf16.msra.mxu0 0
        %944 = vmatprep.mubr.bf16.mxu0 0
        %945 = vmatmul.mubr.bf16.gmra.mrb[0].mxu0 %v839
        %v946 = vpop.f32.mrb[0].mxu0
        %v947 = vadd.f32 %v862, %v946
        %v948 = vpop.f32.mrb[0].mxu0
        %v949 = vpop.f32.mrb[0].mxu0
        %v950 = vadd.f32 %v862, %v949
        %v951 = vpop.f32.mrb[0].mxu0
        %952 = vmatprep.mubr.bf16.mxu0 0
        %953 = vmatmul.mubr.bf16.gmra.mrb[0].mxu0 %v840
        %v954 = vpop.f32.mrb[0].mxu0
        %v955 = vadd.f32 %v862, %v954
        %v956 = vpop.f32.mrb[0].mxu0
        %v957 = vpop.f32.mrb[0].mxu0
        %v958 = vadd.f32 %v862, %v957
        %v959 = vpop.f32.mrb[0].mxu0
        %960 = vdwg.mxu0
        %v961 = vld [vmem:[%s342] sm:$0xff]
        %v962 = vld [vmem:[%s342 + $0x8] sm:$0xff]
        %v963 = vld [vmem:[%s342 + $0x10] sm:$0xff]
        %v964 = vld [vmem:[%s342 + $0x18] sm:$0xff]
        %v965 = vadd.f32 %v961, %v947
        %v966 = vadd.f32 %v962, %v950
        %v967 = vadd.f32 %v963, %v955
        %v968 = vadd.f32 %v964, %v958
        %969 = vst [vmem:[%s386] sm:$0xff] %v965
        %970 = vst [vmem:[%s386 + $0x8] sm:$0xff] %v966
        %971 = vst [vmem:[%s386 + $0x10] sm:$0xff] %v967
        %972 = vst [vmem:[%s386 + $0x18] sm:$0xff] %v968
        %s973 = sand.u32 %s225, 1
        %s974 = scalar_lea.sflag [#allocation6], %s973
        %s975 = sand.u32 %s225, 1
        %s976 = smul.addr %s975, 32
        %s977 = scalar_lea.vmem [#allocation12], %s976
        // Predicated region
        $region73: #{tpu_custom_call.1} parent=51 // pred_check
          %p978 = pneg %p235
        $region74: #{tpu_custom_call.1} parent=51 // pred_check_branch
          %980 = sbr.rel (%p978) target = $region76
        $region75: #{tpu_custom_call.1} parent=51 // pred_region
          %s981 = smul.u32 4, %s33
          %s983 = ssub.s32 512, 512
          %984 = vsyncadd %s974, %s983
          %s985 = smul.addr %s32, 8
          %s986 = sadd.s32 %s981, %s985
          %s987 = smul.addr %s986, 128
          %s988 = scalar_lea.hbm %s9, %s987
          %s989 = sshll.u32 %s977, 4
          %s990 = int_to_ptr.vmem [resolvable:$true] %s989
          %995 = dma.vmem_to_hbm [thread:$0]  %s990, 512, %s988, %s974, 128, 128, 8
        $region76: #{tpu_custom_call.1} parent=51 // pred_fallthru
          _
      $region52: #{tpu_custom_call.1} parent=5 // pred_fallthru
        _
      %p996 = scmp.le.s32.totalorder 2, %s23
      // Predicated region
      $region77: #{tpu_custom_call.1} parent=5 // pred_check
        %p997 = pneg %p996
      $region78: #{tpu_custom_call.1} parent=5 // pred_check_branch
        %999 = sbr.rel (%p997) target = $region80
      $region79: #{tpu_custom_call.1} parent=5 // pred_region
        %s1000 = ssub.s32 %s23, 2
        // Predicated region
        $region81: #{tpu_custom_call.1} parent=79 // pred_check
          %p1001 = pneg %p241
        $region82: #{tpu_custom_call.1} parent=79 // pred_check_branch
          %1003 = sbr.rel (%p1001) target = $region84
        $region83: #{tpu_custom_call.1} parent=79 // pred_region
          %s1004 = sand.u32 %s226, 1
          %s1005 = scalar_lea.sflag [#allocation6], %s1004
          %s1006 = sand.u32 %s226, 1
          %s1007 = smul.addr %s1006, 32
          %s1008 = scalar_lea.vmem [#allocation12], %s1007
          %1009 = dma.done %s1005, 512
        $region84: #{tpu_custom_call.1} parent=79 // pred_fallthru
          _
      $region80: #{tpu_custom_call.1} parent=5 // pred_fallthru
        _
    $region6: #{tpu_custom_call.1} parent=1 // loop_footer
      %s27 = sadd.s32 1, %s23
    $region7: #{tpu_custom_call.1} parent=1 // loop_footer_branch
      %22 = sbr.rel target = $region3
    $region8: #{tpu_custom_call.1} parent=1 // loop_exit
      _
    %1010 = vsyncpa [#allocation5], 1
    %s1011 = scalar_lea.sflag [#allocation5], 1
    %1012 = vsyncpa %s1011, 1
    %1013 = vsyncpa [#allocation8], 1
    %1014 = vsyncpa [#allocation11], 1
    %1015 = vsyncpa [#allocation6], 1
    %s1016 = scalar_lea.sflag [#allocation6], 1
    %1017 = vsyncpa %s1016, 1
  %1018 = vsyncmov [#allocation3]
  %s1019 = vpop.sfrf %1018
  %p1020 = scmp.eq.s32.totalorder %s1019, 0
  %p1021 = pneg %p1020
  %1023 = shalt.err (%p1021)

</llo_original>
